<compile_context>
chip_gen: v7x
topology: tpu7x:2x2x1
jax: 0.10.0
libtpu: 0.0.40
codegen_flags: <defaults>
</compile_context>

<pallas_src>
import functools

import jax
import jax.numpy as jnp
from jax import lax
from jax.experimental import pallas as pl
from jax.experimental.pallas import tpu as pltpu


def _round_up(x, m):
    return ((x + m - 1) // m) * m


def _compute_dtype():
    """bf16 MXU operands on real TPU; f32 elsewhere (CPU/interpret has no bf16 dot)."""
    return jnp.bfloat16 if jax.default_backend() == "tpu" else jnp.float32


def _lane_multiple():
    """Feature-dim padding multiple: 256 on v6e/v7x (256-wide MXU), else 128."""
    try:
        kind = jax.devices()[0].device_kind.lower()
        if "v6" in kind or "v7" in kind:
            return 256
    except Exception:
        pass
    return 128


def _tpu_vmem_budget():
    """Conservative scoped-VMEM budget (bytes) used for tile sizing + vmem_limit."""
    try:
        if jax.default_backend() == "tpu":
            cap = None
            try:
                cap = getattr(pltpu.get_tpu_info(), "vmem_capacity_bytes", None)
            except Exception:
                cap = None
            if cap is None:
                cap = 64 * (1 << 20)          # assume the smallest (v7x-sized) VMEM
            return max(16 << 20, min(int(cap) // 2, 64 << 20))
    except Exception:
        pass
    return 32 << 20


def _max_hw_tile(budget, Cp, Fp, Br, E, cd_bytes):
    """Largest HW tile that keeps the per-step working set inside `budget`."""
    # single-buffered weights + accumulator + small biases
    const_b = (Cp * Fp + Br * Fp + Br * Fp * E) * cd_bytes + 4 * Br * (1 + 2 * E + Fp)
    # per HW-row: double-buffered x, f32 matmul result + compute-dtype feat copy,
    # f32 att + double-buffered mask output
    per_row = 2 * Cp * cd_bytes + Fp * (4 + cd_bytes) + Br * (4 + 2 * cd_bytes)
    avail = budget - const_b - (2 << 20)      # 2 MiB headroom
    tile = (avail // per_row) // 2            # 2x safety for compiler scratch/spill
    return int(max(256, min(tile, 2048)))


def _choose_hw_tiling(hw, max_tile):
    """Return (THW, padded HW). THW is sublane/lane aligned; HWp % THW == 0."""
    if hw <= max_tile:
        thw = _round_up(hw, 8)                # single tile
        return thw, thw
    thw = max(128, (max_tile // 128) * 128)   # lane-aligned tile
    return thw, _round_up(hw, thw)


def _reid_kernel(x_ref, wbb_ref, wattT_ref, battT_ref, wemb_ref, bemb_ref,
                 emb_ref, mask_ref, acc_ref, *, inv_hw):
    """Fused backbone 1x1-conv(+bias folded) + multi-branch attention head.

    Grid: (batch, hw_tiles). Per step:
      x_ref     : (1, THW, Cp)   cd   input pixel tile (ones column appended)
      wbb_ref   : (Cp, Fp)       cd   backbone weight with bias row folded in
      wattT_ref : (Br, Fp)       cd   attention weight (transposed)
      battT_ref : (Br, 1)        f32  attention bias
      wemb_ref  : (Br, Fp, E)    cd   per-branch embedding projection
      bemb_ref  : (Br, E)        f32  per-branch embedding bias
      emb_ref   : (1, Br, E)     f32  output embedding (written on last tile)
      mask_ref  : (1, Br, THW)   cd   output attention mask tile (lane-dense)
      acc_ref   : (Br, Fp)       f32  masked-pool accumulator (VMEM scratch)
    """
    t = pl.program_id(1)

    @pl.when(t == 0)
    def _init():
        acc_ref[...] = jnp.zeros_like(acc_ref)

    # ---- backbone: 1x1 conv (bias folded into the contraction) + ReLU ----
    x = x_ref[0]                                               # [THW, Cp]
    feat = jnp.dot(x, wbb_ref[...], preferred_element_type=jnp.float32)
    # cast first, ReLU in the compute dtype (identical math; halves VALU on v6e/v7x)
    feat = jnp.maximum(feat.astype(x.dtype), 0.0)              # [THW, Fp] cd

    # ---- head: branch attention, computed lane-dense as [Br, THW] ----
    att_logits = lax.dot_general(
        wattT_ref[...], feat,
        dimension_numbers=(((1,), (1,)), ((), ())),            # contract over F
        preferred_element_type=jnp.float32)                    # [Br, THW] f32
    att = jax.nn.sigmoid(att_logits + battT_ref[...])          # f32
    att_c = att.astype(mask_ref.dtype)                         # cd
    mask_ref[0] = att_c                                        # full unmasked store

    # ---- masked average pooling as one MXU contraction over HW ----
    acc_ref[...] += jnp.dot(att_c, feat,
                            preferred_element_type=jnp.float32)  # [Br, Fp] f32

    # ---- finalize: per-branch embedding projection, single output store ----
    @pl.when(t == pl.num_programs(1) - 1)
    def _finalize():
        pooled = (acc_ref[...] * inv_hw).astype(x.dtype)        # [Br, Fp] cd
        emb = jnp.einsum('bqf,bfe->bqe', pooled[:, None, :], wemb_ref[...],
                         preferred_element_type=jnp.float32)[:, 0, :]  # [Br, E]
        emb_ref[0] = emb + bemb_ref[...]


def reid_forward(x_nchw, params, *, max_hw_tile=None):
    """Run the ReID forward pass. x_nchw: [N, Cin, H, W] (PyTorch convention)."""
    wbb, bbb, watt, batt, wemb, bemb = params
    N, Cin, H, W = x_nchw.shape
    HW = H * W
    F = wbb.shape[1]
    Br, _, E = wemb.shape

    cd = _compute_dtype()
    cd_bytes = jnp.dtype(cd).itemsize
    Fp = _round_up(F, _lane_multiple())
    Ca = Cin + 1                                  # ones column for the folded bias
    Cp = _round_up(Ca, 8)

    budget = _tpu_vmem_budget()
    tile_cap = _max_hw_tile(budget, Cp, Fp, Br, E, cd_bytes)
    if max_hw_tile is not None:
        tile_cap = min(tile_cap, int(max_hw_tile))
    THW, HWp = _choose_hw_tiling(HW, tile_cap)
    n_tiles = HWp // THW

    # glue: NCHW -> (N, HWp, Cp); append ones column (folded bias); zero-pad
    # padded HW rows are all-zero (incl. ones column) -> feat=0 -> no pool effect
    x = jnp.transpose(x_nchw, (0, 2, 3, 1)).reshape(N, HW, Cin)
    x = jnp.concatenate([x, jnp.ones((N, HW, 1), x.dtype)], axis=-1)
    x = jnp.pad(x, ((0, 0), (0, HWp - HW), (0, Cp - Ca))).astype(cd)

    wbb_aug = jnp.concatenate([wbb, bbb.reshape(1, F)], axis=0)       # (Ca, F)
    wbb_aug = jnp.pad(wbb_aug, ((0, Cp - Ca), (0, Fp - F))).astype(cd)
    wattT = jnp.pad(watt, ((0, Fp - F), (0, 0))).T.astype(cd)         # (Br, Fp)
    battT = batt.reshape(Br, 1).astype(jnp.float32)
    wemb_p = jnp.pad(wemb, ((0, 0), (0, Fp - F), (0, 0))).astype(cd)
    bemb_f = bemb.astype(jnp.float32)

    kernel = functools.partial(_reid_kernel, inv_hw=1.0 / HW)
    single = pl.Buffered(1)   # grid-invariant operands: no double-buffering

    emb, masks = pl.pallas_call(
        kernel,
        out_shape=(
            jax.ShapeDtypeStruct((N, Br, E), jnp.float32),
            jax.ShapeDtypeStruct((N, Br, HWp), cd),
        ),
        grid_spec=pltpu.PrefetchScalarGridSpec(
            num_scalar_prefetch=0,
            grid=(N, n_tiles),
            in_specs=[
                pl.BlockSpec((1, THW, Cp), lambda n, t: (n, t, 0)),
                pl.BlockSpec((Cp, Fp), lambda n, t: (0, 0),
                             pipeline_mode=single),
                pl.BlockSpec((Br, Fp), lambda n, t: (0, 0),
                             pipeline_mode=single),
                pl.BlockSpec((Br, 1), lambda n, t: (0, 0),
                             pipeline_mode=single),
                pl.BlockSpec((Br, Fp, E), lambda n, t: (0, 0, 0),
                             pipeline_mode=single),
                pl.BlockSpec((Br, E), lambda n, t: (0, 0),
                             pipeline_mode=single),
            ],
            out_specs=[
                pl.BlockSpec((1, Br, E), lambda n, t: (n, 0, 0)),
                pl.BlockSpec((1, Br, THW), lambda n, t: (n, 0, t)),
            ],
            scratch_shapes=[pltpu.VMEM((Br, Fp), jnp.float32)],
        ),
        compiler_params=pltpu.CompilerParams(
            dimension_semantics=("parallel", "arbitrary"),
            vmem_limit_bytes=int(budget)),
    )(x, wbb_aug, wattT, battT, wemb_p, bemb_f)

    # glue: masks are already (N, Br, HWp) lane-dense; drop the padded tail
    embedding_feature = emb.reshape(N, Br * E)
    multi_mask = masks[:, :, :HW].reshape(N, Br, H, W)
    return embedding_feature, multi_mask


def reid_reference(x_nchw, params):
    """Pure-JAX reference mirroring the kernel's compute-dtype / f32-accum math."""
    wbb, bbb, watt, batt, wemb, bemb = params
    cd = _compute_dtype()
    N, Cin, H, W = x_nchw.shape
    HW = H * W
    Br, F, E = wemb.shape
    x = jnp.transpose(x_nchw, (0, 2, 3, 1)).reshape(N, HW, Cin).astype(cd)
    feat = jnp.einsum('nhc,cf->nhf', x, wbb.astype(cd),
                      preferred_element_type=jnp.float32) + bbb
    feat = jnp.maximum(feat, 0.0).astype(cd)
    att = jax.nn.sigmoid(
        jnp.einsum('nhf,fb->nhb', feat, watt.astype(cd),
                   preferred_element_type=jnp.float32) + batt)
    pooled = (jnp.einsum('nhb,nhf->nbf', att.astype(cd), feat,
                         preferred_element_type=jnp.float32) / HW).astype(cd)
    emb = jnp.einsum('nbf,bfe->nbe', pooled, wemb.astype(cd),
                     preferred_element_type=jnp.float32) + bemb
    mask = jnp.transpose(att, (0, 2, 1)).reshape(N, Br, H, W)
    return emb.reshape(N, Br * E), mask


def init_params(key, cin, feature_dim, embedding_dim, branch_number):
    k = jax.random.split(key, 6)
    wbb = jax.random.normal(k[0], (cin, feature_dim), jnp.float32) * 0.1
    bbb = jax.random.normal(k[1], (1, feature_dim), jnp.float32) * 0.01
    watt = jax.random.normal(k[2], (feature_dim, branch_number), jnp.float32) * 0.1
    batt = jax.random.normal(k[3], (1, branch_number), jnp.float32) * 0.01
    wemb = jax.random.normal(
        k[4], (branch_number, feature_dim, embedding_dim), jnp.float32) * 0.1
    bemb = jax.random.normal(
        k[5], (branch_number, embedding_dim), jnp.float32) * 0.01
    return (wbb, bbb, watt, batt, wemb, bemb)


if __name__ == "__main__":
    import numpy as np

    # small shapes consistent with the module's forward
    N, Cin, H, W = 2, 4, 16, 16
    feature_dim, embedding_dim, branch_number = 32, 16, 2

    key = jax.random.PRNGKey(0)
    kx, kp = jax.random.split(key)
    x = jax.random.normal(kx, (N, Cin, H, W), jnp.float32)
    params = init_params(kp, Cin, feature_dim, embedding_dim, branch_number)

    fwd = jax.jit(reid_forward)
    emb, multi_mask = fwd(x, params)
    jax.block_until_ready((emb, multi_mask))

    assert emb.shape == (N, branch_number * embedding_dim)
    assert multi_mask.shape == (N, branch_number, H, W)

    emb_ref, mask_ref = reid_reference(x, params)
    np.testing.assert_allclose(np.asarray(emb, dtype=np.float32),
                               np.asarray(emb_ref, dtype=np.float32),
                               rtol=5e-2, atol=5e-3)
    np.testing.assert_allclose(np.asarray(multi_mask.astype(jnp.float32)),
                               np.asarray(mask_ref, dtype=np.float32),
                               rtol=5e-2, atol=1e-2)
    print("KERNEL_OK")
</pallas_src>

<mosaic_0001>
module attributes {stable_mosaic.version = 11 : i64} {
  func.func @_reid_kernel(%arg0: i32, %arg1: i32, %arg2: memref<1x256x8xf32, #tpu.memory_space<vmem>>, %arg3: memref<8x128xf32, #tpu.memory_space<vmem>>, %arg4: memref<2x128xf32, #tpu.memory_space<vmem>>, %arg5: memref<2x1xf32, #tpu.memory_space<vmem>>, %arg6: memref<2x128x16xf32, #tpu.memory_space<vmem>>, %arg7: memref<2x16xf32, #tpu.memory_space<vmem>>, %arg8: memref<1x2x16xf32, #tpu.memory_space<vmem>>, %arg9: memref<1x2x256xf32, #tpu.memory_space<vmem>>, %arg10: memref<2x128xf32, #tpu.memory_space<vmem>>) attributes {dimension_semantics = [#tpu.dimension_semantics<parallel>, #tpu.dimension_semantics<arbitrary>], iteration_bounds = array<i64: 2, 1>, scalar_prefetch = 0 : i64, scratch_operands = 1 : i64, tpu.core_type = #tpu.core_type<tc>, window_params = [{transform_indices = @transform_0, window_bounds = array<i64: 1, 256, 8>}, {pipeline_mode = #tpu.pipeline_mode<synchronous>, transform_indices = @transform_1, window_bounds = array<i64: 8, 128>}, {pipeline_mode = #tpu.pipeline_mode<synchronous>, transform_indices = @transform_2, window_bounds = array<i64: 2, 128>}, {pipeline_mode = #tpu.pipeline_mode<synchronous>, transform_indices = @transform_3, window_bounds = array<i64: 2, 1>}, {pipeline_mode = #tpu.pipeline_mode<synchronous>, transform_indices = @transform_4, window_bounds = array<i64: 2, 128, 16>}, {pipeline_mode = #tpu.pipeline_mode<synchronous>, transform_indices = @transform_5, window_bounds = array<i64: 2, 16>}, {transform_indices = @transform_6, window_bounds = array<i64: 1, 2, 16>}, {transform_indices = @transform_7, window_bounds = array<i64: 1, 2, 256>}]} {
    %c0_i32 = arith.constant 0 : i32
    %0 = arith.cmpi eq, %arg1, %c0_i32 : i32
    %1 = arith.extui %0 : i1 to i32
    %c0_i32_0 = arith.constant 0 : i32
    %2 = arith.cmpi ne, %1, %c0_i32_0 : i32
    scf.if %2 {
      %cst_22 = arith.constant 0.000000e+00 : f32
      %29 = vector.broadcast %cst_22 : f32 to vector<2x128xf32>
      %c0_23 = arith.constant 0 : index
      %c0_24 = arith.constant 0 : index
      %30 = vector.load %arg10[%c0_23, %c0_24] : memref<2x128xf32, #tpu.memory_space<vmem>>, vector<2x128xf32>
      tpu.vector_store %arg10[%c0_23, %c0_24], %29 {strides = array<i32>} : memref<2x128xf32, #tpu.memory_space<vmem>>, vector<2x128xf32>,
    } else {
    }
    %c0 = arith.constant 0 : index
    %c0_1 = arith.constant 0 : index
    %c0_2 = arith.constant 0 : index
    %3 = vector.load %arg2[%c0, %c0_1, %c0_2] : memref<1x256x8xf32, #tpu.memory_space<vmem>>, vector<1x256x8xf32>
    %4 = vector.shape_cast %3 : vector<1x256x8xf32> to vector<256x8xf32>
    %c0_3 = arith.constant 0 : index
    %c0_4 = arith.constant 0 : index
    %5 = vector.load %arg3[%c0_3, %c0_4] : memref<8x128xf32, #tpu.memory_space<vmem>>, vector<8x128xf32>
    %cst = arith.constant dense<0.000000e+00> : vector<256x128xf32>
    %6 = tpu.matmul %4, %5, %cst {dimension_numbers = #tpu.dot_dimension_numbers<[1], [0], [0], [1], [0, 0, 1, 1], [], []>} : vector<256x8xf32>, vector<8x128xf32>, vector<256x128xf32> -> vector<256x128xf32>
    %cst_5 = arith.constant 0.000000e+00 : f32
    %7 = vector.broadcast %cst_5 : f32 to vector<256x128xf32>
    %8 = arith.maximumf %6, %7 : vector<256x128xf32>
    %c0_6 = arith.constant 0 : index
    %c0_7 = arith.constant 0 : index
    %9 = vector.load %arg4[%c0_6, %c0_7] : memref<2x128xf32, #tpu.memory_space<vmem>>, vector<2x128xf32>
    %cst_8 = arith.constant dense<0.000000e+00> : vector<2x256xf32>
    %10 = tpu.matmul %9, %8, %cst_8 {dimension_numbers = #tpu.dot_dimension_numbers<[1], [1], [0], [0], [0, 0, 1, 0], [], []>} : vector<2x128xf32>, vector<256x128xf32>, vector<2x256xf32> -> vector<2x256xf32>
    %c0_9 = arith.constant 0 : index
    %c0_10 = arith.constant 0 : index
    %11 = vector.load %arg5[%c0_9, %c0_10] : memref<2x1xf32, #tpu.memory_space<vmem>>, vector<2x1xf32>
    %12 = vector.broadcast %11 : vector<2x1xf32> to vector<2x256xf32>
    %13 = arith.addf %10, %12 : vector<2x256xf32>
    %14 = arith.negf %13 : vector<2x256xf32>
    %15 = math.exp %14 : vector<2x256xf32>
    %cst_11 = arith.constant 1.000000e+00 : f32
    %16 = vector.broadcast %cst_11 : f32 to vector<2x256xf32>
    %17 = arith.addf %16, %15 : vector<2x256xf32>
    %18 = arith.divf %16, %17 : vector<2x256xf32>
    %c0_12 = arith.constant 0 : index
    %c0_13 = arith.constant 0 : index
    %c0_14 = arith.constant 0 : index
    %19 = vector.load %arg9[%c0_12, %c0_13, %c0_14] : memref<1x2x256xf32, #tpu.memory_space<vmem>>, vector<1x2x256xf32>
    %20 = vector.shape_cast %19 : vector<1x2x256xf32> to vector<2x256xf32>
    %21 = vector.shape_cast %18 : vector<2x256xf32> to vector<1x2x256xf32>
    tpu.vector_store %arg9[%c0_12, %c0_13, %c0_14], %21 {strides = array<i32>} : memref<1x2x256xf32, #tpu.memory_space<vmem>>, vector<1x2x256xf32>,
    %c0_15 = arith.constant 0 : index
    %c0_16 = arith.constant 0 : index
    %22 = vector.load %arg10[%c0_15, %c0_16] : memref<2x128xf32, #tpu.memory_space<vmem>>, vector<2x128xf32>
    %cst_17 = arith.constant dense<0.000000e+00> : vector<2x128xf32>
    %23 = tpu.matmul %18, %8, %cst_17 {dimension_numbers = #tpu.dot_dimension_numbers<[1], [0], [0], [1], [0, 0, 1, 1], [], []>} : vector<2x256xf32>, vector<256x128xf32>, vector<2x128xf32> -> vector<2x128xf32>
    %24 = arith.addf %22, %23 : vector<2x128xf32>
    %c0_18 = arith.constant 0 : index
    %c0_19 = arith.constant 0 : index
    %25 = vector.load %arg10[%c0_18, %c0_19] : memref<2x128xf32, #tpu.memory_space<vmem>>, vector<2x128xf32>
    tpu.vector_store %arg10[%c0_18, %c0_19], %24 {strides = array<i32>} : memref<2x128xf32, #tpu.memory_space<vmem>>, vector<2x128xf32>,
    %c0_i32_20 = arith.constant 0 : i32
    %26 = arith.cmpi eq, %arg1, %c0_i32_20 : i32
    %27 = arith.extui %26 : i1 to i32
    %c0_i32_21 = arith.constant 0 : i32
    %28 = arith.cmpi ne, %27, %c0_i32_21 : i32
    scf.if %28 {
      %c0_22 = arith.constant 0 : index
      %c0_23 = arith.constant 0 : index
      %29 = vector.load %arg10[%c0_22, %c0_23] : memref<2x128xf32, #tpu.memory_space<vmem>>, vector<2x128xf32>
      %cst_24 = arith.constant 3.906250e-03 : f32
      %30 = vector.broadcast %cst_24 : f32 to vector<2x128xf32>
      %31 = arith.mulf %29, %30 : vector<2x128xf32>
      %32 = vector.shape_cast %31 : vector<2x128xf32> to vector<2x1x128xf32>
      %c0_25 = arith.constant 0 : index
      %c0_26 = arith.constant 0 : index
      %c0_27 = arith.constant 0 : index
      %33 = vector.load %arg6[%c0_25, %c0_26, %c0_27] : memref<2x128x16xf32, #tpu.memory_space<vmem>>, vector<2x128x16xf32>
      "tpu.trace_start"() <{level = 10 : i32, message = "bqf,bfe->bqe"}> : () -> ()
      %cst_28 = arith.constant dense<0.000000e+00> : vector<2x1x16xf32>
      %34 = tpu.matmul %32, %33, %cst_28 {dimension_numbers = #tpu.dot_dimension_numbers<[2], [1], [1], [2], [0, 0, 0, 1, 1, 2], [0], [0]>} : vector<2x1x128xf32>, vector<2x128x16xf32>, vector<2x1x16xf32> -> vector<2x1x16xf32>
      "tpu.trace_stop"() : () -> ()
      %35 = vector.shape_cast %34 : vector<2x1x16xf32> to vector<2x16xf32>
      %c0_29 = arith.constant 0 : index
      %c0_30 = arith.constant 0 : index
      %36 = vector.load %arg7[%c0_29, %c0_30] : memref<2x16xf32, #tpu.memory_space<vmem>>, vector<2x16xf32>
      %37 = arith.addf %35, %36 : vector<2x16xf32>
      %c0_31 = arith.constant 0 : index
      %c0_32 = arith.constant 0 : index
      %c0_33 = arith.constant 0 : index
      %38 = vector.load %arg8[%c0_31, %c0_32, %c0_33] : memref<1x2x16xf32, #tpu.memory_space<vmem>>, vector<1x2x16xf32>
      %39 = vector.shape_cast %38 : vector<1x2x16xf32> to vector<2x16xf32>
      %40 = vector.shape_cast %37 : vector<2x16xf32> to vector<1x2x16xf32>
      tpu.vector_store %arg8[%c0_31, %c0_32, %c0_33], %40 {strides = array<i32>} : memref<1x2x16xf32, #tpu.memory_space<vmem>>, vector<1x2x16xf32>,
    } else {
    }
    return
  }
  func.func @transform_0(%arg0: i32, %arg1: i32) -> (i32, i32, i32) {
    %c0_i32 = arith.constant 0 : i32
    %c0_i32_0 = arith.constant 0 : i32
    return %arg0, %arg1, %c0_i32 : i32, i32, i32
  }
  func.func @transform_1(%arg0: i32, %arg1: i32) -> (i32, i32) {
    %c0_i32 = arith.constant 0 : i32
    %c0_i32_0 = arith.constant 0 : i32
    %c0_i32_1 = arith.constant 0 : i32
    return %c0_i32, %c0_i32_0 : i32, i32
  }
  func.func @transform_2(%arg0: i32, %arg1: i32) -> (i32, i32) {
    %c0_i32 = arith.constant 0 : i32
    %c0_i32_0 = arith.constant 0 : i32
    %c0_i32_1 = arith.constant 0 : i32
    return %c0_i32, %c0_i32_0 : i32, i32
  }
  func.func @transform_3(%arg0: i32, %arg1: i32) -> (i32, i32) {
    %c0_i32 = arith.constant 0 : i32
    %c0_i32_0 = arith.constant 0 : i32
    %c0_i32_1 = arith.constant 0 : i32
    return %c0_i32, %c0_i32_0 : i32, i32
  }
  func.func @transform_4(%arg0: i32, %arg1: i32) -> (i32, i32, i32) {
    %c0_i32 = arith.constant 0 : i32
    %c0_i32_0 = arith.constant 0 : i32
    %c0_i32_1 = arith.constant 0 : i32
    %c0_i32_2 = arith.constant 0 : i32
    return %c0_i32, %c0_i32_0, %c0_i32_1 : i32, i32, i32
  }
  func.func @transform_5(%arg0: i32, %arg1: i32) -> (i32, i32) {
    %c0_i32 = arith.constant 0 : i32
    %c0_i32_0 = arith.constant 0 : i32
    %c0_i32_1 = arith.constant 0 : i32
    return %c0_i32, %c0_i32_0 : i32, i32
  }
  func.func @transform_6(%arg0: i32, %arg1: i32) -> (i32, i32, i32) {
    %c0_i32 = arith.constant 0 : i32
    %c0_i32_0 = arith.constant 0 : i32
    %c0_i32_1 = arith.constant 0 : i32
    return %arg0, %c0_i32, %c0_i32_0 : i32, i32, i32
  }
  func.func @transform_7(%arg0: i32, %arg1: i32) -> (i32, i32, i32) {
    %c0_i32 = arith.constant 0 : i32
    %c0_i32_0 = arith.constant 0 : i32
    return %arg0, %c0_i32, %arg1 : i32, i32, i32
  }
}

</mosaic_0001>

<llo_original>
// kernel: reid_forward.1
$region0: #{reid_forward.1}
  #allocation0 [shape = 'u32[]', space=smem, size = 0x4, offset = 0x4, fixed_abs, tag = 'smem constant byte address 0x4 - core index']
  #allocation1 [shape = 'u32[144,128]{1,0:T(1,128)}', space=vmem, size = 0x12000, scoped, tag = 'internal scratch']
  #allocation2 [shape = 'f32[2,128]{1,0:T(2,128)}', space=vmem, size = 0x400, scoped, tag = 'scratch operand']
  %s0 = inlined_call_operand.vmem [shape: f32[2,256,8], index: 0, kind: input, shape index: {}]
  %s1 = inlined_call_operand.vmem [shape: f32[8,128], index: 1, kind: input, shape index: {}]
  %s2 = inlined_call_operand.vmem [shape: f32[2,128], index: 2, kind: input, shape index: {}]
  %s3 = inlined_call_operand.vmem [shape: f32[2,1], index: 3, kind: input, shape index: {}]
  %s4 = inlined_call_operand.vmem [shape: f32[2,128,16], index: 4, kind: input, shape index: {}]
  %s5 = inlined_call_operand.vmem [shape: f32[2,16], index: 5, kind: input, shape index: {}]
  %s6 = inlined_call_operand.vmem [shape: f32[2,2,16], index: 6, kind: output, shape index: {0}]
  %s7 = inlined_call_operand.vmem [shape: f32[2,2,256], index: 7, kind: output, shape index: {1}]
  %8 = xla_tuple %s6, %s7
  %s9 = sld [smem:[#allocation0]]
  $region73: #{reid_forward.1} parent=0
    _
  %s11 = ssub.s32 1, %s9
  %s12 = scalar_select 0, %s11, %s9
  loop: start=0, step=1, limit=4
  $region2: #{reid_forward.1} parent=0 // loop_pre_header
    _
  $region3: #{reid_forward.1} parent=0 // loop_header
    %s14 = sphi 0, %s18
    %p15 = scmp.ge.s32.totalorder %s14, 4
    %s21 = sphi 0, %s33
    %s22 = sphi 0, %s29
    %s23 = sphi 0, %s21
    %s24 = sphi 0, %s22
    %s25 = sphi 0, %s23
    %s26 = sphi 0, %s24
    %s38 = sphi 0, %s40
    %s41 = sphi 0, %s38
    %s42 = sphi 0, %s41
    %s58 = sphi 0, %s42
    %s62 = sphi 0, %s62
    %s64 = sphi 0, %s62
    %s65 = sphi 0, %s64
    %s79 = sphi 0, %s65
    %s83 = sphi 0, %s83
    %s85 = sphi 0, %s83
    %s86 = sphi 0, %s85
    %s100 = sphi 0, %s86
    %s104 = sphi 0, %s104
    %s106 = sphi 0, %s104
    %s107 = sphi 0, %s106
    %s121 = sphi 0, %s107
    %s125 = sphi 0, %s125
    %s127 = sphi 0, %s125
    %s128 = sphi 0, %s127
    %s142 = sphi 0, %s128
    %s146 = sphi 0, %s146
    %s148 = sphi 0, %s146
    %s149 = sphi 0, %s148
    %s163 = sphi 0, %s149
    %s169 = sphi 0, %s171
    %s172 = sphi 0, %s169
    %s173 = sphi 0, %s172
    %s189 = sphi 0, %s173
    %s197 = sphi 0, %s199
    %s200 = sphi 0, %s197
    %s201 = sphi 0, %s200
    %s217 = sphi 0, %s201
  $region4: #{reid_forward.1} parent=0 // loop_header_branch
    %17 = sbr.rel (%p15) target = $region8
  $region5: #{reid_forward.1} parent=0 // loop_body
    %s19 = ssub.s32 %s14, 1
    %s20 = ssub.s32 %s14, 2
    %s27 = sadd.s32 1, %s22
    %p28 = scmp.ge.s32.totalorder %s27, 1
    %s29 = scalar_select %p28, 0, %s27
    %s30 = sadd.s32 1, %s21
    %s31 = scalar_select %p28, %s30, %s21
    %p32 = scmp.ge.s32.totalorder %s31, 2
    %s33 = scalar_select %p32, 0, %s31
    %s34 = ssub.s32 %s21, %s33
    %s35 = ssub.s32 %s22, %s29
    %s36 = sor.u32 %s34, %s35
    %p37 = scmp.eq.s32.totalorder %s36, 0
    %s39 = sadd.s32 %s38, 1
    %s40 = scalar_select %p37, %s38, %s39
    %p43 = pneg %p37
    %p44 = scmp.eq.s32.totalorder %s14, 1
    %p45 = por %p43, %p44
    %p46 = scmp.ne.s32.totalorder %s38, %s41
    %p47 = scmp.eq.s32.totalorder %s14, 0
    %p48 = por %p46, %p47
    %p49 = scmp.ne.s32.totalorder %s38, %s41
    %p50 = scmp.eq.s32.totalorder %s19, 1
    %p51 = por %p49, %p50
    %p52 = scmp.ne.s32.totalorder %s41, %s42
    %p53 = scmp.eq.s32.totalorder %s19, 0
    %p54 = por %p52, %p53
    %p55 = scmp.ne.s32.totalorder %s41, %s42
    %p56 = scmp.eq.s32.totalorder %s20, 1
    %p57 = por %p55, %p56
    %p59 = scmp.ne.s32.totalorder %s42, %s58
    %p60 = scmp.eq.s32.totalorder %s20, 0
    %p61 = por %p59, %p60
    %s63 = sadd.s32 %s62, 1
    %p66 = scmp.eq.s32.totalorder %s14, 1
    %p67 = scmp.ne.s32.totalorder %s62, %s64
    %p68 = scmp.eq.s32.totalorder %s14, 0
    %p69 = por %p67, %p68
    %p70 = scmp.ne.s32.totalorder %s62, %s64
    %p71 = scmp.eq.s32.totalorder %s19, 1
    %p72 = por %p70, %p71
    %p73 = scmp.ne.s32.totalorder %s64, %s65
    %p74 = scmp.eq.s32.totalorder %s19, 0
    %p75 = por %p73, %p74
    %p76 = scmp.ne.s32.totalorder %s64, %s65
    %p77 = scmp.eq.s32.totalorder %s20, 1
    %p78 = por %p76, %p77
    %p80 = scmp.ne.s32.totalorder %s65, %s79
    %p81 = scmp.eq.s32.totalorder %s20, 0
    %p82 = por %p80, %p81
    %s84 = sadd.s32 %s83, 1
    %p87 = scmp.eq.s32.totalorder %s14, 1
    %p88 = scmp.ne.s32.totalorder %s83, %s85
    %p89 = scmp.eq.s32.totalorder %s14, 0
    %p90 = por %p88, %p89
    %p91 = scmp.ne.s32.totalorder %s83, %s85
    %p92 = scmp.eq.s32.totalorder %s19, 1
    %p93 = por %p91, %p92
    %p94 = scmp.ne.s32.totalorder %s85, %s86
    %p95 = scmp.eq.s32.totalorder %s19, 0
    %p96 = por %p94, %p95
    %p97 = scmp.ne.s32.totalorder %s85, %s86
    %p98 = scmp.eq.s32.totalorder %s20, 1
    %p99 = por %p97, %p98
    %p101 = scmp.ne.s32.totalorder %s86, %s100
    %p102 = scmp.eq.s32.totalorder %s20, 0
    %p103 = por %p101, %p102
    %s105 = sadd.s32 %s104, 1
    %p108 = scmp.eq.s32.totalorder %s14, 1
    %p109 = scmp.ne.s32.totalorder %s104, %s106
    %p110 = scmp.eq.s32.totalorder %s14, 0
    %p111 = por %p109, %p110
    %p112 = scmp.ne.s32.totalorder %s104, %s106
    %p113 = scmp.eq.s32.totalorder %s19, 1
    %p114 = por %p112, %p113
    %p115 = scmp.ne.s32.totalorder %s106, %s107
    %p116 = scmp.eq.s32.totalorder %s19, 0
    %p117 = por %p115, %p116
    %p118 = scmp.ne.s32.totalorder %s106, %s107
    %p119 = scmp.eq.s32.totalorder %s20, 1
    %p120 = por %p118, %p119
    %p122 = scmp.ne.s32.totalorder %s107, %s121
    %p123 = scmp.eq.s32.totalorder %s20, 0
    %p124 = por %p122, %p123
    %s126 = sadd.s32 %s125, 1
    %p129 = scmp.eq.s32.totalorder %s14, 1
    %p130 = scmp.ne.s32.totalorder %s125, %s127
    %p131 = scmp.eq.s32.totalorder %s14, 0
    %p132 = por %p130, %p131
    %p133 = scmp.ne.s32.totalorder %s125, %s127
    %p134 = scmp.eq.s32.totalorder %s19, 1
    %p135 = por %p133, %p134
    %p136 = scmp.ne.s32.totalorder %s127, %s128
    %p137 = scmp.eq.s32.totalorder %s19, 0
    %p138 = por %p136, %p137
    %p139 = scmp.ne.s32.totalorder %s127, %s128
    %p140 = scmp.eq.s32.totalorder %s20, 1
    %p141 = por %p139, %p140
    %p143 = scmp.ne.s32.totalorder %s128, %s142
    %p144 = scmp.eq.s32.totalorder %s20, 0
    %p145 = por %p143, %p144
    %s147 = sadd.s32 %s146, 1
    %p150 = scmp.eq.s32.totalorder %s14, 1
    %p151 = scmp.ne.s32.totalorder %s146, %s148
    %p152 = scmp.eq.s32.totalorder %s14, 0
    %p153 = por %p151, %p152
    %p154 = scmp.ne.s32.totalorder %s146, %s148
    %p155 = scmp.eq.s32.totalorder %s19, 1
    %p156 = por %p154, %p155
    %p157 = scmp.ne.s32.totalorder %s148, %s149
    %p158 = scmp.eq.s32.totalorder %s19, 0
    %p159 = por %p157, %p158
    %p160 = scmp.ne.s32.totalorder %s148, %s149
    %p161 = scmp.eq.s32.totalorder %s20, 1
    %p162 = por %p160, %p161
    %p164 = scmp.ne.s32.totalorder %s149, %s163
    %p165 = scmp.eq.s32.totalorder %s20, 0
    %p166 = por %p164, %p165
    %s167 = ssub.s32 %s21, %s33
    %p168 = scmp.eq.s32.totalorder %s167, 0
    %s170 = sadd.s32 %s169, 1
    %s171 = scalar_select %p168, %s169, %s170
    %p174 = pneg %p168
    %p175 = scmp.eq.s32.totalorder %s14, 1
    %p176 = por %p174, %p175
    %p177 = scmp.ne.s32.totalorder %s169, %s172
    %p178 = scmp.eq.s32.totalorder %s14, 0
    %p179 = por %p177, %p178
    %p180 = scmp.ne.s32.totalorder %s169, %s172
    %p181 = scmp.eq.s32.totalorder %s19, 1
    %p182 = por %p180, %p181
    %p183 = scmp.ne.s32.totalorder %s172, %s173
    %p184 = scmp.eq.s32.totalorder %s19, 0
    %p185 = por %p183, %p184
    %p186 = scmp.ne.s32.totalorder %s172, %s173
    %p187 = scmp.eq.s32.totalorder %s20, 1
    %p188 = por %p186, %p187
    %p190 = scmp.ne.s32.totalorder %s173, %s189
    %p191 = scmp.eq.s32.totalorder %s20, 0
    %p192 = por %p190, %p191
    %s193 = ssub.s32 %s21, %s33
    %s194 = ssub.s32 %s22, %s29
    %s195 = sor.u32 %s193, %s194
    %p196 = scmp.eq.s32.totalorder %s195, 0
    %s198 = sadd.s32 %s197, 1
    %s199 = scalar_select %p196, %s197, %s198
    %p202 = pneg %p196
    %p203 = scmp.eq.s32.totalorder %s14, 1
    %p204 = por %p202, %p203
    %p205 = scmp.ne.s32.totalorder %s197, %s200
    %p206 = scmp.eq.s32.totalorder %s14, 0
    %p207 = por %p205, %p206
    %p208 = scmp.ne.s32.totalorder %s197, %s200
    %p209 = scmp.eq.s32.totalorder %s19, 1
    %p210 = por %p208, %p209
    %p211 = scmp.ne.s32.totalorder %s200, %s201
    %p212 = scmp.eq.s32.totalorder %s19, 0
    %p213 = por %p211, %p212
    %p214 = scmp.ne.s32.totalorder %s200, %s201
    %p215 = scmp.eq.s32.totalorder %s20, 1
    %p216 = por %p214, %p215
    %p218 = scmp.ne.s32.totalorder %s201, %s217
    %p219 = scmp.eq.s32.totalorder %s20, 0
    %p220 = por %p218, %p219
    %p221 = scmp.le.s32.totalorder 1, %s14
    %p222 = scmp.lt.s32.totalorder %s14, 3
    %p223 = pnand %p221, %p222
    %p224 = pneg %p223
    // Predicated region
    $region9: #{reid_forward.1} parent=5 // pred_check
      _
    $region10: #{reid_forward.1} parent=5 // pred_check_branch
      %226 = sbr.rel (%p223) target = $region12
    $region11: #{reid_forward.1} parent=5 // pred_region
      %s227 = ssub.s32 %s14, 1
      // Predicated region
      $region13: #{reid_forward.1} parent=11 // pred_check
        %p228 = pneg %p75
      $region14: #{reid_forward.1} parent=11 // pred_check_branch
        %230 = sbr.rel (%p228) target = $region16
      $region15: #{reid_forward.1} parent=11 // pred_region
        _
      $region16: #{reid_forward.1} parent=11 // pred_fallthru
        _
      // Predicated region
      $region17: #{reid_forward.1} parent=11 // pred_check
        %p231 = pneg %p96
      $region18: #{reid_forward.1} parent=11 // pred_check_branch
        %233 = sbr.rel (%p231) target = $region20
      $region19: #{reid_forward.1} parent=11 // pred_region
        _
      $region20: #{reid_forward.1} parent=11 // pred_fallthru
        _
      // Predicated region
      $region21: #{reid_forward.1} parent=11 // pred_check
        %p234 = pneg %p117
      $region22: #{reid_forward.1} parent=11 // pred_check_branch
        %236 = sbr.rel (%p234) target = $region24
      $region23: #{reid_forward.1} parent=11 // pred_region
        _
      $region24: #{reid_forward.1} parent=11 // pred_fallthru
        _
      // Predicated region
      $region25: #{reid_forward.1} parent=11 // pred_check
        %p237 = pneg %p138
      $region26: #{reid_forward.1} parent=11 // pred_check_branch
        %239 = sbr.rel (%p237) target = $region28
      $region27: #{reid_forward.1} parent=11 // pred_region
        _
      $region28: #{reid_forward.1} parent=11 // pred_fallthru
        _
      // Predicated region
      $region29: #{reid_forward.1} parent=11 // pred_check
        %p240 = pneg %p159
      $region30: #{reid_forward.1} parent=11 // pred_check_branch
        %242 = sbr.rel (%p240) target = $region32
      $region31: #{reid_forward.1} parent=11 // pred_region
        _
      $region32: #{reid_forward.1} parent=11 // pred_fallthru
        _
    $region12: #{reid_forward.1} parent=5 // pred_fallthru
      _
    %p243 = scmp.lt.s32.totalorder %s14, 2
    // Predicated region
    $region33: #{reid_forward.1} parent=5 // pred_check
      %p244 = pneg %p243
    $region34: #{reid_forward.1} parent=5 // pred_check_branch
      %246 = sbr.rel (%p244) target = $region36
    $region35: #{reid_forward.1} parent=5 // pred_region
      // Predicated region
      $region37: #{reid_forward.1} parent=35 // pred_check
        %p247 = pneg %p48
      $region38: #{reid_forward.1} parent=35 // pred_check_branch
        %249 = sbr.rel (%p247) target = $region40
      $region39: #{reid_forward.1} parent=35 // pred_region
        %s250 = smul.u32 32, %s22
        %p251 = scmp.lt.s32.totalorder %s21, 1
        %s252 = scalar_select %p251, %s21, 1
        %p253 = scmp.lt.s32.totalorder %s250, 31
        %s254 = scalar_select %p253, %s250, 31
        %s255 = smul.addr %s252, 32
        %s256 = sadd.s32 %s254, %s255
        %s257 = smul.addr %s256, 8
        %s258 = scalar_lea.vmem %s0, %s257
        %s259 = smul.u32 32, %s22
      $region40: #{reid_forward.1} parent=35 // pred_fallthru
        _
    $region36: #{reid_forward.1} parent=5 // pred_fallthru
      _
    %p260 = scmp.le.s32.totalorder 1, %s14
    %p261 = scmp.lt.s32.totalorder %s14, 3
    %p262 = pnand %p260, %p261
    %p263 = pneg %p262
    // Predicated region
    $region41: #{reid_forward.1} parent=5 // pred_check
      _
    $region42: #{reid_forward.1} parent=5 // pred_check_branch
      %265 = sbr.rel (%p262) target = $region44
    $region43: #{reid_forward.1} parent=5 // pred_region
      %s266 = ssub.s32 %s14, 1
      %s267 = smul.u32 32, %s24
      %p268 = scmp.lt.s32.totalorder %s23, 1
      %s269 = scalar_select %p268, %s23, 1
      %p270 = scmp.lt.s32.totalorder %s267, 31
      %s271 = scalar_select %p270, %s267, 31
      %s272 = smul.addr %s269, 32
      %s273 = sadd.s32 %s271, %s272
      %s274 = smul.addr %s273, 8
      %s275 = scalar_lea.vmem %s0, %s274
      %p276 = pneg %p54
      %p277 = pneg %p51
      %p278 = pneg %p75
      %p279 = pneg %p72
      %p280 = pneg %p96
      %p281 = pneg %p93
      %p282 = pneg %p117
      %p283 = pneg %p114
      %p284 = pneg %p138
      %p285 = pneg %p135
      %p286 = pneg %p159
      %p287 = pneg %p156
      %p288 = pneg %p185
      %p289 = pneg %p182
      %p290 = scmp.lt.s32.totalorder %s23, 1
      %s291 = scalar_select %p290, %s23, 1
      %s292 = smul.addr %s291, 2
      %s293 = scalar_lea.vmem %s6, %s292
      %p294 = pneg %p213
      %p295 = pneg %p210
      %s296 = smul.u32 2, %s24
      %p297 = scmp.lt.s32.totalorder %s23, 1
      %s298 = scalar_select %p297, %s23, 1
      %p299 = scmp.lt.s32.totalorder %s296, 1
      %s300 = scalar_select %p299, %s296, 1
      %s301 = smul.addr %s298, 2
      %s302 = sadd.s32 %s300, %s301
      %s303 = smul.addr %s302, 2
      %s304 = scalar_lea.vmem %s7, %s303
      %s305 = smul.u32 32, %s24
      %p306 = scmp.lt.s32.totalorder %s23, 1
      %s307 = scalar_select %p306, %s23, 1
      %p308 = scmp.lt.s32.totalorder %s305, 31
      %s309 = scalar_select %p308, %s305, 31
      %s310 = smul.addr %s307, 32
      %s311 = sadd.s32 %s309, %s310
      %s312 = smul.addr %s311, 8
      %s313 = scalar_lea.vmem %s0, %s312
      %s314 = smul.u32 32, %s24
      %p315 = scmp.lt.s32.totalorder %s23, 1
      %s316 = scalar_select %p315, %s23, 1
      %s317 = smul.addr %s316, 2
      %s318 = scalar_lea.vmem %s6, %s317
      %s319 = smul.u32 2, %s24
      %p320 = scmp.lt.s32.totalorder %s23, 1
      %s321 = scalar_select %p320, %s23, 1
      %p322 = scmp.lt.s32.totalorder %s319, 1
      %s323 = scalar_select %p322, %s319, 1
      %s324 = smul.addr %s321, 2
      %s325 = sadd.s32 %s323, %s324
      %s326 = smul.addr %s325, 2
      %s327 = scalar_lea.vmem %s7, %s326
      %s328 = smul.u32 2, %s24
      %p329 = scmp.eq.s32.totalorder %s24, 0
      // Predicated region
      $region45: #{reid_forward.1} parent=43 // pred_check
        %p330 = pneg %p329
      $region46: #{reid_forward.1} parent=43 // pred_check_branch
        %332 = sbr.rel (%p330) target = $region48
      $region47: #{reid_forward.1} parent=43 // pred_region
        %333 = vst [vmem:[#allocation2] sm:$0x3] 0.0
      $region48: #{reid_forward.1} parent=43 // pred_fallthru
        _
      %v334 = vld [vmem:[%s313] sm:$0xff]
      %v335 = vld [vmem:[%s313 + $0x8] sm:$0xff]
      %v336 = vld [vmem:[%s313 + $0x10] sm:$0xff]
      %v337 = vld [vmem:[%s313 + $0x18] sm:$0xff]
      %v338 = vld [vmem:[%s313 + $0x20] sm:$0xff]
      %v339 = vld [vmem:[%s313 + $0x28] sm:$0xff]
      %v340 = vld [vmem:[%s313 + $0x30] sm:$0xff]
      %v341 = vld [vmem:[%s313 + $0x38] sm:$0xff]
      %v342 = vld [vmem:[%s313 + $0x40] sm:$0xff]
      %v343 = vld [vmem:[%s313 + $0x48] sm:$0xff]
      %v344 = vld [vmem:[%s313 + $0x50] sm:$0xff]
      %v345 = vld [vmem:[%s313 + $0x58] sm:$0xff]
      %v346 = vld [vmem:[%s313 + $0x60] sm:$0xff]
      %v347 = vld [vmem:[%s313 + $0x68] sm:$0xff]
      %v348 = vld [vmem:[%s313 + $0x70] sm:$0xff]
      %v349 = vld [vmem:[%s313 + $0x78] sm:$0xff]
      %v350 = vld [vmem:[%s313 + $0x80] sm:$0xff]
      %v351 = vld [vmem:[%s313 + $0x88] sm:$0xff]
      %v352 = vld [vmem:[%s313 + $0x90] sm:$0xff]
      %v353 = vld [vmem:[%s313 + $0x98] sm:$0xff]
      %v354 = vld [vmem:[%s313 + $0xa0] sm:$0xff]
      %v355 = vld [vmem:[%s313 + $0xa8] sm:$0xff]
      %v356 = vld [vmem:[%s313 + $0xb0] sm:$0xff]
      %v357 = vld [vmem:[%s313 + $0xb8] sm:$0xff]
      %v358 = vld [vmem:[%s313 + $0xc0] sm:$0xff]
      %v359 = vld [vmem:[%s313 + $0xc8] sm:$0xff]
      %v360 = vld [vmem:[%s313 + $0xd0] sm:$0xff]
      %v361 = vld [vmem:[%s313 + $0xd8] sm:$0xff]
      %v362 = vld [vmem:[%s313 + $0xe0] sm:$0xff]
      %v363 = vld [vmem:[%s313 + $0xe8] sm:$0xff]
      %v364 = vld [vmem:[%s313 + $0xf0] sm:$0xff]
      %v365 = vld [vmem:[%s313 + $0xf8] sm:$0xff]
      %v366 = vld [vmem:[%s1] sm:$0xff]
      %vm367 = vcmask 64512
      %v369 = vsel %vm367, %v334, 0
      %v372 = vsel %vm367, %v335, 0
      %v375 = vsel %vm367, %v336, 0
      %v378 = vsel %vm367, %v337, 0
      %v381 = vsel %vm367, %v338, 0
      %v384 = vsel %vm367, %v339, 0
      %v387 = vsel %vm367, %v340, 0
      %v390 = vsel %vm367, %v341, 0
      %v393 = vsel %vm367, %v342, 0
      %v396 = vsel %vm367, %v343, 0
      %v399 = vsel %vm367, %v344, 0
      %v402 = vsel %vm367, %v345, 0
      %v405 = vsel %vm367, %v346, 0
      %v408 = vsel %vm367, %v347, 0
      %v411 = vsel %vm367, %v348, 0
      %v414 = vsel %vm367, %v349, 0
      %v417 = vsel %vm367, %v350, 0
      %v420 = vsel %vm367, %v351, 0
      %v423 = vsel %vm367, %v352, 0
      %v426 = vsel %vm367, %v353, 0
      %v429 = vsel %vm367, %v354, 0
      %v432 = vsel %vm367, %v355, 0
      %v435 = vsel %vm367, %v356, 0
      %v438 = vsel %vm367, %v357, 0
      %v441 = vsel %vm367, %v358, 0
      %v444 = vsel %vm367, %v359, 0
      %v447 = vsel %vm367, %v360, 0
      %v450 = vsel %vm367, %v361, 0
      %v453 = vsel %vm367, %v362, 0
      %v456 = vsel %vm367, %v363, 0
      %v459 = vsel %vm367, %v364, 0
      %v462 = vsel %vm367, %v365, 0
      %464 = vmatprep.subr.mxu0 0.0
      %465 = vmatpush1.msra.mxu0 %v366
      %466 = vmatprep.subr.mxu0 0.0
      %467 = vmatpush1.msra.mxu0 0.0
      %468 = vmatprep.subr.mxu0 0.0
      %469 = vmatpush1.msra.mxu0 0.0
      %470 = vmatprep.subr.mxu0 0.0
      %471 = vmatpush1.msra.mxu0 0.0
      %472 = vmatprep.subr.mxu0 0.0
      %473 = vmatpush1.msra.mxu0 0.0
      %474 = vmatprep.subr.mxu0 0.0
      %475 = vmatpush1.msra.mxu0 0.0
      %476 = vmatprep.subr.mxu0 0.0
      %477 = vmatpush1.msra.mxu0 0.0
      %478 = vmatprep.subr.mxu0 0.0
      %479 = vmatpush1.msra.mxu0 0.0
      %480 = vmatprep.subr.mxu0 0.0
      %481 = vmatpush1.msra.mxu0 0.0
      %482 = vmatprep.subr.mxu0 0.0
      %483 = vmatpush1.msra.mxu0 0.0
      %484 = vmatprep.subr.mxu0 0.0
      %485 = vmatpush1.msra.mxu0 0.0
      %486 = vmatprep.subr.mxu0 0.0
      %487 = vmatpush1.msra.mxu0 0.0
      %488 = vmatprep.subr.mxu0 0.0
      %489 = vmatpush1.msra.mxu0 0.0
      %490 = vmatprep.subr.mxu0 0.0
      %491 = vmatpush1.msra.mxu0 0.0
      %492 = vmatprep.subr.mxu0 0.0
      %493 = vmatpush1.msra.mxu0 0.0
      %494 = vmatprep.subr.mxu0 0.0
      %495 = vmatpush1.msra.mxu0 0.0
      %496 = vmatprep.subr.mxu0 0.0
      %497 = vmatpush1.msra.mxu0 0.0
      %498 = vmatprep.subr.mxu0 0.0
      %499 = vmatpush1.msra.mxu0 0.0
      %500 = vmatprep.subr.mxu0 0.0
      %501 = vmatpush1.msra.mxu0 0.0
      %502 = vmatprep.subr.mxu0 0.0
      %503 = vmatpush1.msra.mxu0 0.0
      %504 = vmatprep.subr.mxu0 0.0
      %505 = vmatpush1.msra.mxu0 0.0
      %506 = vmatprep.subr.mxu0 0.0
      %507 = vmatpush1.msra.mxu0 0.0
      %508 = vmatprep.subr.mxu0 0.0
      %509 = vmatpush1.msra.mxu0 0.0
      %510 = vmatprep.subr.mxu0 0.0
      %511 = vmatpush1.msra.mxu0 0.0
      %512 = vmatprep.subr.mxu0 0.0
      %513 = vmatpush1.msra.mxu0 0.0
      %514 = vmatprep.subr.mxu0 0.0
      %515 = vmatpush1.msra.mxu0 0.0
      %516 = vmatprep.subr.mxu0 0.0
      %517 = vmatpush1.msra.mxu0 0.0
      %518 = vmatprep.subr.mxu0 0.0
      %519 = vmatpush1.msra.mxu0 0.0
      %520 = vmatprep.subr.mxu0 0.0
      %521 = vmatpush1.msra.mxu0 0.0
      %522 = vmatprep.subr.mxu0 0.0
      %523 = vmatpush1.msra.mxu0 0.0
      %524 = vmatprep.subr.mxu0 0.0
      %525 = vmatpush1.msra.mxu0 0.0
      %526 = vmatprep.subr.mxu0 0.0
      %527 = vmatpush1.msra.mxu0 0.0
      %528 = vmatprep.mubr.f32.mxu0 0.0
      %529 = vmatmul.mubr.f32.gmra.mrb[0].mxu0 %v369
      %v530 = vpop.f32.mrb[0].mxu0
      %v531 = vadd.f32 0.0, %v530
      %v532 = vpop.f32.mrb[0].mxu0
      %533 = vmatprep.mubr.f32.mxu0 0.0
      %534 = vmatmul.mubr.f32.gmra.mrb[0].mxu0 %v372
      %v535 = vpop.f32.mrb[0].mxu0
      %v536 = vadd.f32 0.0, %v535
      %v537 = vpop.f32.mrb[0].mxu0
      %538 = vmatprep.mubr.f32.mxu0 0.0
      %539 = vmatmul.mubr.f32.gmra.mrb[0].mxu0 %v375
      %v540 = vpop.f32.mrb[0].mxu0
      %v541 = vadd.f32 0.0, %v540
      %v542 = vpop.f32.mrb[0].mxu0
      %543 = vmatprep.mubr.f32.mxu0 0.0
      %544 = vmatmul.mubr.f32.gmra.mrb[0].mxu0 %v378
      %v545 = vpop.f32.mrb[0].mxu0
      %v546 = vadd.f32 0.0, %v545
      %v547 = vpop.f32.mrb[0].mxu0
      %548 = vmatprep.mubr.f32.mxu0 0.0
      %549 = vmatmul.mubr.f32.gmra.mrb[0].mxu0 %v381
      %v550 = vpop.f32.mrb[0].mxu0
      %v551 = vadd.f32 0.0, %v550
      %v552 = vpop.f32.mrb[0].mxu0
      %553 = vmatprep.mubr.f32.mxu0 0.0
      %554 = vmatmul.mubr.f32.gmra.mrb[0].mxu0 %v384
      %v555 = vpop.f32.mrb[0].mxu0
      %v556 = vadd.f32 0.0, %v555
      %v557 = vpop.f32.mrb[0].mxu0
      %558 = vmatprep.mubr.f32.mxu0 0.0
      %559 = vmatmul.mubr.f32.gmra.mrb[0].mxu0 %v387
      %v560 = vpop.f32.mrb[0].mxu0
      %v561 = vadd.f32 0.0, %v560
      %v562 = vpop.f32.mrb[0].mxu0
      %563 = vmatprep.mubr.f32.mxu0 0.0
      %564 = vmatmul.mubr.f32.gmra.mrb[0].mxu0 %v390
      %v565 = vpop.f32.mrb[0].mxu0
      %v566 = vadd.f32 0.0, %v565
      %v567 = vpop.f32.mrb[0].mxu0
      %568 = vmatprep.mubr.f32.mxu0 0.0
      %569 = vmatmul.mubr.f32.gmra.mrb[0].mxu0 %v393
      %v570 = vpop.f32.mrb[0].mxu0
      %v571 = vadd.f32 0.0, %v570
      %v572 = vpop.f32.mrb[0].mxu0
      %573 = vmatprep.mubr.f32.mxu0 0.0
      %574 = vmatmul.mubr.f32.gmra.mrb[0].mxu0 %v396
      %v575 = vpop.f32.mrb[0].mxu0
      %v576 = vadd.f32 0.0, %v575
      %v577 = vpop.f32.mrb[0].mxu0
      %578 = vmatprep.mubr.f32.mxu0 0.0
      %579 = vmatmul.mubr.f32.gmra.mrb[0].mxu0 %v399
      %v580 = vpop.f32.mrb[0].mxu0
      %v581 = vadd.f32 0.0, %v580
      %v582 = vpop.f32.mrb[0].mxu0
      %583 = vmatprep.mubr.f32.mxu0 0.0
      %584 = vmatmul.mubr.f32.gmra.mrb[0].mxu0 %v402
      %v585 = vpop.f32.mrb[0].mxu0
      %v586 = vadd.f32 0.0, %v585
      %v587 = vpop.f32.mrb[0].mxu0
      %588 = vmatprep.mubr.f32.mxu0 0.0
      %589 = vmatmul.mubr.f32.gmra.mrb[0].mxu0 %v405
      %v590 = vpop.f32.mrb[0].mxu0
      %v591 = vadd.f32 0.0, %v590
      %v592 = vpop.f32.mrb[0].mxu0
      %593 = vmatprep.mubr.f32.mxu0 0.0
      %594 = vmatmul.mubr.f32.gmra.mrb[0].mxu0 %v408
      %v595 = vpop.f32.mrb[0].mxu0
      %v596 = vadd.f32 0.0, %v595
      %v597 = vpop.f32.mrb[0].mxu0
      %598 = vmatprep.mubr.f32.mxu0 0.0
      %599 = vmatmul.mubr.f32.gmra.mrb[0].mxu0 %v411
      %v600 = vpop.f32.mrb[0].mxu0
      %v601 = vadd.f32 0.0, %v600
      %v602 = vpop.f32.mrb[0].mxu0
      %603 = vmatprep.mubr.f32.mxu0 0.0
      %604 = vmatmul.mubr.f32.gmra.mrb[0].mxu0 %v414
      %v605 = vpop.f32.mrb[0].mxu0
      %v606 = vadd.f32 0.0, %v605
      %v607 = vpop.f32.mrb[0].mxu0
      %608 = vmatprep.mubr.f32.mxu0 0.0
      %609 = vmatmul.mubr.f32.gmra.mrb[0].mxu0 %v417
      %v610 = vpop.f32.mrb[0].mxu0
      %v611 = vadd.f32 0.0, %v610
      %v612 = vpop.f32.mrb[0].mxu0
      %613 = vmatprep.mubr.f32.mxu0 0.0
      %614 = vmatmul.mubr.f32.gmra.mrb[0].mxu0 %v420
      %v615 = vpop.f32.mrb[0].mxu0
      %v616 = vadd.f32 0.0, %v615
      %v617 = vpop.f32.mrb[0].mxu0
      %618 = vmatprep.mubr.f32.mxu0 0.0
      %619 = vmatmul.mubr.f32.gmra.mrb[0].mxu0 %v423
      %v620 = vpop.f32.mrb[0].mxu0
      %v621 = vadd.f32 0.0, %v620
      %v622 = vpop.f32.mrb[0].mxu0
      %623 = vmatprep.mubr.f32.mxu0 0.0
      %624 = vmatmul.mubr.f32.gmra.mrb[0].mxu0 %v426
      %v625 = vpop.f32.mrb[0].mxu0
      %v626 = vadd.f32 0.0, %v625
      %v627 = vpop.f32.mrb[0].mxu0
      %628 = vmatprep.mubr.f32.mxu0 0.0
      %629 = vmatmul.mubr.f32.gmra.mrb[0].mxu0 %v429
      %v630 = vpop.f32.mrb[0].mxu0
      %v631 = vadd.f32 0.0, %v630
      %v632 = vpop.f32.mrb[0].mxu0
      %633 = vmatprep.mubr.f32.mxu0 0.0
      %634 = vmatmul.mubr.f32.gmra.mrb[0].mxu0 %v432
      %v635 = vpop.f32.mrb[0].mxu0
      %v636 = vadd.f32 0.0, %v635
      %v637 = vpop.f32.mrb[0].mxu0
      %638 = vmatprep.mubr.f32.mxu0 0.0
      %639 = vmatmul.mubr.f32.gmra.mrb[0].mxu0 %v435
      %v640 = vpop.f32.mrb[0].mxu0
      %v641 = vadd.f32 0.0, %v640
      %v642 = vpop.f32.mrb[0].mxu0
      %643 = vmatprep.mubr.f32.mxu0 0.0
      %644 = vmatmul.mubr.f32.gmra.mrb[0].mxu0 %v438
      %v645 = vpop.f32.mrb[0].mxu0
      %v646 = vadd.f32 0.0, %v645
      %v647 = vpop.f32.mrb[0].mxu0
      %648 = vmatprep.mubr.f32.mxu0 0.0
      %649 = vmatmul.mubr.f32.gmra.mrb[0].mxu0 %v441
      %v650 = vpop.f32.mrb[0].mxu0
      %v651 = vadd.f32 0.0, %v650
      %v652 = vpop.f32.mrb[0].mxu0
      %653 = vmatprep.mubr.f32.mxu0 0.0
      %654 = vmatmul.mubr.f32.gmra.mrb[0].mxu0 %v444
      %v655 = vpop.f32.mrb[0].mxu0
      %v656 = vadd.f32 0.0, %v655
      %v657 = vpop.f32.mrb[0].mxu0
      %658 = vmatprep.mubr.f32.mxu0 0.0
      %659 = vmatmul.mubr.f32.gmra.mrb[0].mxu0 %v447
      %v660 = vpop.f32.mrb[0].mxu0
      %v661 = vadd.f32 0.0, %v660
      %v662 = vpop.f32.mrb[0].mxu0
      %663 = vmatprep.mubr.f32.mxu0 0.0
      %664 = vmatmul.mubr.f32.gmra.mrb[0].mxu0 %v450
      %v665 = vpop.f32.mrb[0].mxu0
      %v666 = vadd.f32 0.0, %v665
      %v667 = vpop.f32.mrb[0].mxu0
      %668 = vmatprep.mubr.f32.mxu0 0.0
      %669 = vmatmul.mubr.f32.gmra.mrb[0].mxu0 %v453
      %v670 = vpop.f32.mrb[0].mxu0
      %v671 = vadd.f32 0.0, %v670
      %v672 = vpop.f32.mrb[0].mxu0
      %673 = vmatprep.mubr.f32.mxu0 0.0
      %674 = vmatmul.mubr.f32.gmra.mrb[0].mxu0 %v456
      %v675 = vpop.f32.mrb[0].mxu0
      %v676 = vadd.f32 0.0, %v675
      %v677 = vpop.f32.mrb[0].mxu0
      %678 = vmatprep.mubr.f32.mxu0 0.0
      %679 = vmatmul.mubr.f32.gmra.mrb[0].mxu0 %v459
      %v680 = vpop.f32.mrb[0].mxu0
      %v681 = vadd.f32 0.0, %v680
      %v682 = vpop.f32.mrb[0].mxu0
      %683 = vmatprep.mubr.f32.mxu0 0.0
      %684 = vmatmul.mubr.f32.gmra.mrb[0].mxu0 %v462
      %v685 = vpop.f32.mrb[0].mxu0
      %v686 = vadd.f32 0.0, %v685
      %v687 = vpop.f32.mrb[0].mxu0
      %688 = vdwg.mxu0
      %v689 = vmax.f32 %v531, 0.0
      %v690 = vmax.f32 %v536, 0.0
      %v691 = vmax.f32 %v541, 0.0
      %v692 = vmax.f32 %v546, 0.0
      %v693 = vmax.f32 %v551, 0.0
      %v694 = vmax.f32 %v556, 0.0
      %v695 = vmax.f32 %v561, 0.0
      %v696 = vmax.f32 %v566, 0.0
      %v697 = vmax.f32 %v571, 0.0
      %v698 = vmax.f32 %v576, 0.0
      %v699 = vmax.f32 %v581, 0.0
      %v700 = vmax.f32 %v586, 0.0
      %v701 = vmax.f32 %v591, 0.0
      %v702 = vmax.f32 %v596, 0.0
      %v703 = vmax.f32 %v601, 0.0
      %v704 = vmax.f32 %v606, 0.0
      %v705 = vmax.f32 %v611, 0.0
      %v706 = vmax.f32 %v616, 0.0
      %v707 = vmax.f32 %v621, 0.0
      %v708 = vmax.f32 %v626, 0.0
      %v709 = vmax.f32 %v631, 0.0
      %v710 = vmax.f32 %v636, 0.0
      %v711 = vmax.f32 %v641, 0.0
      %v712 = vmax.f32 %v646, 0.0
      %v713 = vmax.f32 %v651, 0.0
      %v714 = vmax.f32 %v656, 0.0
      %v715 = vmax.f32 %v661, 0.0
      %v716 = vmax.f32 %v666, 0.0
      %v717 = vmax.f32 %v671, 0.0
      %v718 = vmax.f32 %v676, 0.0
      %v719 = vmax.f32 %v681, 0.0
      %v720 = vmax.f32 %v686, 0.0
      %v721 = vld [vmem:[%s2] sm:$0x3]
      %v722 = vld [vmem:[%s3] sm:$0x3]
      %724 = vset.pattern.permute.xlu0 0
      %725 = vperm.xlu0 %724, %v722
      %v726 = vpop.permute.xlu0 %725
      %728 = vmatprep.subr.mxu0 0.0
      %729 = vmatpush1.xpose.msra.mxu0 %v689
      %730 = vmatprep.subr.mxu0 0.0
      %731 = vmatpush1.xpose.msra.mxu0 %v690
      %732 = vmatprep.subr.mxu0 0.0
      %733 = vmatpush1.xpose.msra.mxu0 %v691
      %734 = vmatprep.subr.mxu0 0.0
      %735 = vmatpush1.xpose.msra.mxu0 %v692
      %736 = vmatprep.subr.mxu0 0.0
      %737 = vmatpush1.xpose.msra.mxu0 %v693
      %738 = vmatprep.subr.mxu0 0.0
      %739 = vmatpush1.xpose.msra.mxu0 %v694
      %740 = vmatprep.subr.mxu0 0.0
      %741 = vmatpush1.xpose.msra.mxu0 %v695
      %742 = vmatprep.subr.mxu0 0.0
      %743 = vmatpush1.xpose.msra.mxu0 %v696
      %744 = vmatprep.subr.mxu0 0.0
      %745 = vmatpush1.xpose.msra.mxu0 %v697
      %746 = vmatprep.subr.mxu0 0.0
      %747 = vmatpush1.xpose.msra.mxu0 %v698
      %748 = vmatprep.subr.mxu0 0.0
      %749 = vmatpush1.xpose.msra.mxu0 %v699
      %750 = vmatprep.subr.mxu0 0.0
      %751 = vmatpush1.xpose.msra.mxu0 %v700
      %752 = vmatprep.subr.mxu0 0.0
      %753 = vmatpush1.xpose.msra.mxu0 %v701
      %754 = vmatprep.subr.mxu0 0.0
      %755 = vmatpush1.xpose.msra.mxu0 %v702
      %756 = vmatprep.subr.mxu0 0.0
      %757 = vmatpush1.xpose.msra.mxu0 %v703
      %758 = vmatprep.subr.mxu0 0.0
      %759 = vmatpush1.xpose.msra.mxu0 %v704
      %760 = vmatprep.subr.mxu0 0.0
      %761 = vmatpush1.xpose.msra.mxu0 %v705
      %762 = vmatprep.subr.mxu0 0.0
      %763 = vmatpush1.xpose.msra.mxu0 %v706
      %764 = vmatprep.subr.mxu0 0.0
      %765 = vmatpush1.xpose.msra.mxu0 %v707
      %766 = vmatprep.subr.mxu0 0.0
      %767 = vmatpush1.xpose.msra.mxu0 %v708
      %768 = vmatprep.subr.mxu0 0.0
      %769 = vmatpush1.xpose.msra.mxu0 %v709
      %770 = vmatprep.subr.mxu0 0.0
      %771 = vmatpush1.xpose.msra.mxu0 %v710
      %772 = vmatprep.subr.mxu0 0.0
      %773 = vmatpush1.xpose.msra.mxu0 %v711
      %774 = vmatprep.subr.mxu0 0.0
      %775 = vmatpush1.xpose.msra.mxu0 %v712
      %776 = vmatprep.subr.mxu0 0.0
      %777 = vmatpush1.xpose.msra.mxu0 %v713
      %778 = vmatprep.subr.mxu0 0.0
      %779 = vmatpush1.xpose.msra.mxu0 %v714
      %780 = vmatprep.subr.mxu0 0.0
      %781 = vmatpush1.xpose.msra.mxu0 %v715
      %782 = vmatprep.subr.mxu0 0.0
      %783 = vmatpush1.xpose.msra.mxu0 %v716
      %784 = vmatprep.subr.mxu0 0.0
      %785 = vmatpush1.xpose.msra.mxu0 %v717
      %786 = vmatprep.subr.mxu0 0.0
      %787 = vmatpush1.xpose.msra.mxu0 %v718
      %788 = vmatprep.subr.mxu0 0.0
      %789 = vmatpush1.xpose.msra.mxu0 %v719
      %790 = vmatprep.subr.mxu0 0.0
      %791 = vmatpush1.xpose.msra.mxu0 %v720
      %792 = vmatprep.mubr.f32.mxu0 0.0
      %793 = vmatmul.mubr.f32.gmra.mrb[0].mxu0 %v721
      %v794 = vpop.f32.mrb[0].mxu0
      %v795 = vadd.f32 %v726, %v794
      %v796 = vpop.f32.mrb[0].mxu0
      %v797 = vadd.f32 %v726, %v796
      %798 = vdwg.mxu0
      %v799 = vxor.u32 %v795, 2147483648
      %v800 = vxor.u32 %v797, 2147483648
      %v801 = vmul.f32 %v799, 1.442695
      %v802 = vpow.pop %v801
      %v803 = vmul.f32 %v800, 1.442695
      %v804 = vpow.pop %v803
      %v805 = vadd.f32 %v802, 1.0
      %v806 = vadd.f32 %v804, 1.0
      %v807 = vrcp.pop %v805
      %v808 = vmul.f32 1.0, %v807
      %v809 = vrcp.pop %v806
      %v810 = vmul.f32 1.0, %v809
      %v813 = vcombine.low %v808, %v810
      %v815 = vunpack.c.l.s4 1983009808
      %v816 = vunpack.c.0.s8 %v815
      %v817 = vlaneseq
      %v818 = vshrl.u32 %v817, 7
      %v819 = vsub.s32 %v816, %v818
      %v820 = vrot.slane %v813, %v819
      %822 = vst [vmem:[%s327] sm:$0xf] %v820
      %v823 = vld [vmem:[#allocation2] sm:$0x3]
      %824 = vmatprep.subr.mxu0 0.0
      %825 = vmatpush1.msra.mxu0 %v689
      %826 = vmatprep.subr.mxu0 0.0
      %827 = vmatpush1.msra.mxu0 %v690
      %828 = vmatprep.subr.mxu0 0.0
      %829 = vmatpush1.msra.mxu0 %v691
      %830 = vmatprep.subr.mxu0 0.0
      %831 = vmatpush1.msra.mxu0 %v692
      %832 = vmatprep.subr.mxu0 0.0
      %833 = vmatpush1.msra.mxu0 %v693
      %834 = vmatprep.subr.mxu0 0.0
      %835 = vmatpush1.msra.mxu0 %v694
      %836 = vmatprep.subr.mxu0 0.0
      %837 = vmatpush1.msra.mxu0 %v695
      %838 = vmatprep.subr.mxu0 0.0
      %839 = vmatpush1.msra.mxu0 %v696
      %840 = vmatprep.subr.mxu0 0.0
      %841 = vmatpush1.msra.mxu0 %v697
      %842 = vmatprep.subr.mxu0 0.0
      %843 = vmatpush1.msra.mxu0 %v698
      %844 = vmatprep.subr.mxu0 0.0
      %845 = vmatpush1.msra.mxu0 %v699
      %846 = vmatprep.subr.mxu0 0.0
      %847 = vmatpush1.msra.mxu0 %v700
      %848 = vmatprep.subr.mxu0 0.0
      %849 = vmatpush1.msra.mxu0 %v701
      %850 = vmatprep.subr.mxu0 0.0
      %851 = vmatpush1.msra.mxu0 %v702
      %852 = vmatprep.subr.mxu0 0.0
      %853 = vmatpush1.msra.mxu0 %v703
      %854 = vmatprep.subr.mxu0 0.0
      %855 = vmatpush1.msra.mxu0 %v704
      %856 = vmatprep.subr.mxu0 0.0
      %857 = vmatpush1.msra.mxu0 %v705
      %858 = vmatprep.subr.mxu0 0.0
      %859 = vmatpush1.msra.mxu0 %v706
      %860 = vmatprep.subr.mxu0 0.0
      %861 = vmatpush1.msra.mxu0 %v707
      %862 = vmatprep.subr.mxu0 0.0
      %863 = vmatpush1.msra.mxu0 %v708
      %864 = vmatprep.subr.mxu0 0.0
      %865 = vmatpush1.msra.mxu0 %v709
      %866 = vmatprep.subr.mxu0 0.0
      %867 = vmatpush1.msra.mxu0 %v710
      %868 = vmatprep.subr.mxu0 0.0
      %869 = vmatpush1.msra.mxu0 %v711
      %870 = vmatprep.subr.mxu0 0.0
      %871 = vmatpush1.msra.mxu0 %v712
      %872 = vmatprep.subr.mxu0 0.0
      %873 = vmatpush1.msra.mxu0 %v713
      %874 = vmatprep.subr.mxu0 0.0
      %875 = vmatpush1.msra.mxu0 %v714
      %876 = vmatprep.subr.mxu0 0.0
      %877 = vmatpush1.msra.mxu0 %v715
      %878 = vmatprep.subr.mxu0 0.0
      %879 = vmatpush1.msra.mxu0 %v716
      %880 = vmatprep.subr.mxu0 0.0
      %881 = vmatpush1.msra.mxu0 %v717
      %882 = vmatprep.subr.mxu0 0.0
      %883 = vmatpush1.msra.mxu0 %v718
      %884 = vmatprep.subr.mxu0 0.0
      %885 = vmatpush1.msra.mxu0 %v719
      %886 = vmatprep.subr.mxu0 0.0
      %887 = vmatpush1.msra.mxu0 %v720
      %888 = vmatprep.mubr.f32.mxu0 %v810
      %889 = vmatmul.mubr.f32.gmra.mrb[0].mxu0 %v808
      %v890 = vpop.f32.mrb[0].mxu0
      %v891 = vadd.f32 0.0, %v890
      %v892 = vpop.f32.mrb[0].mxu0
      %893 = vdwg.mxu0
      %v894 = vadd.f32 %v823, %v891
      %895 = vst [vmem:[#allocation2] sm:$0x3] %v894
      // Predicated region
      $region49: #{reid_forward.1} parent=43 // pred_check
        %p896 = pneg %p329
      $region50: #{reid_forward.1} parent=43 // pred_check_branch
        %898 = sbr.rel (%p896) target = $region52
      $region51: #{reid_forward.1} parent=43 // pred_region
        %v899 = vld [vmem:[#allocation2] sm:$0x3]
        %v900 = vmul.f32 %v899, 0.00390625
        %v903 = vunpack.c.l.s4 1966171168
        %v904 = vunpack.c.0.s8 %v903
        %v905 = vlaneseq
        %v906 = vshrl.u32 %v905, 7
        %v907 = vsub.s32 %v904, %v906
        %v908 = vrot.slane %v900, %v907
        %v909 = vcombine.high %v908, %v908
        %v911 = vunpack.c.l.s4 1966171168
        %v912 = vunpack.c.0.s8 %v911
        %v913 = vlaneseq
        %v914 = vshrl.u32 %v913, 7
        %v915 = vsub.s32 %v912, %v914
        %v916 = vrot.slane %v908, %v915
        %v918 = vunpack.c.l.s4 1966171168
        %v919 = vunpack.c.0.s8 %v918
        %v920 = vlaneseq
        %v921 = vshrl.u32 %v920, 7
        %v922 = vsub.s32 %v919, %v921
        %v923 = vrot.slane %v909, %v922
        %v926 = vld [vmem:[%s4] sm:$0xff]
        %v927 = vld [vmem:[%s4 + $0x8] sm:$0xff]
        %v928 = vld [vmem:[%s4 + $0x10] sm:$0xff]
        %v929 = vld [vmem:[%s4 + $0x18] sm:$0xff]
        %v930 = vld [vmem:[%s4 + $0x20] sm:$0xff]
        %v931 = vld [vmem:[%s4 + $0x28] sm:$0xff]
        %v932 = vld [vmem:[%s4 + $0x30] sm:$0xff]
        %v933 = vld [vmem:[%s4 + $0x38] sm:$0xff]
        %v934 = vld [vmem:[%s4 + $0x40] sm:$0xff]
        %v935 = vld [vmem:[%s4 + $0x48] sm:$0xff]
        %v936 = vld [vmem:[%s4 + $0x50] sm:$0xff]
        %v937 = vld [vmem:[%s4 + $0x58] sm:$0xff]
        %v938 = vld [vmem:[%s4 + $0x60] sm:$0xff]
        %v939 = vld [vmem:[%s4 + $0x68] sm:$0xff]
        %v940 = vld [vmem:[%s4 + $0x70] sm:$0xff]
        %v941 = vld [vmem:[%s4 + $0x78] sm:$0xff]
        %v942 = vld [vmem:[%s4 + $0x80] sm:$0xff]
        %v943 = vld [vmem:[%s4 + $0x88] sm:$0xff]
        %v944 = vld [vmem:[%s4 + $0x90] sm:$0xff]
        %v945 = vld [vmem:[%s4 + $0x98] sm:$0xff]
        %v946 = vld [vmem:[%s4 + $0xa0] sm:$0xff]
        %v947 = vld [vmem:[%s4 + $0xa8] sm:$0xff]
        %v948 = vld [vmem:[%s4 + $0xb0] sm:$0xff]
        %v949 = vld [vmem:[%s4 + $0xb8] sm:$0xff]
        %v950 = vld [vmem:[%s4 + $0xc0] sm:$0xff]
        %v951 = vld [vmem:[%s4 + $0xc8] sm:$0xff]
        %v952 = vld [vmem:[%s4 + $0xd0] sm:$0xff]
        %v953 = vld [vmem:[%s4 + $0xd8] sm:$0xff]
        %v954 = vld [vmem:[%s4 + $0xe0] sm:$0xff]
        %v955 = vld [vmem:[%s4 + $0xe8] sm:$0xff]
        %v956 = vld [vmem:[%s4 + $0xf0] sm:$0xff]
        %v957 = vld [vmem:[%s4 + $0xf8] sm:$0xff]
        %958 = vmatprep.subr.mxu0 0.0
        %959 = vmatpush1.msra.mxu0 %v926
        %960 = vmatprep.subr.mxu0 0.0
        %961 = vmatpush1.msra.mxu0 %v927
        %962 = vmatprep.subr.mxu0 0.0
        %963 = vmatpush1.msra.mxu0 %v928
        %964 = vmatprep.subr.mxu0 0.0
        %965 = vmatpush1.msra.mxu0 %v929
        %966 = vmatprep.subr.mxu0 0.0
        %967 = vmatpush1.msra.mxu0 %v930
        %968 = vmatprep.subr.mxu0 0.0
        %969 = vmatpush1.msra.mxu0 %v931
        %970 = vmatprep.subr.mxu0 0.0
        %971 = vmatpush1.msra.mxu0 %v932
        %972 = vmatprep.subr.mxu0 0.0
        %973 = vmatpush1.msra.mxu0 %v933
        %974 = vmatprep.subr.mxu0 0.0
        %975 = vmatpush1.msra.mxu0 %v934
        %976 = vmatprep.subr.mxu0 0.0
        %977 = vmatpush1.msra.mxu0 %v935
        %978 = vmatprep.subr.mxu0 0.0
        %979 = vmatpush1.msra.mxu0 %v936
        %980 = vmatprep.subr.mxu0 0.0
        %981 = vmatpush1.msra.mxu0 %v937
        %982 = vmatprep.subr.mxu0 0.0
        %983 = vmatpush1.msra.mxu0 %v938
        %984 = vmatprep.subr.mxu0 0.0
        %985 = vmatpush1.msra.mxu0 %v939
        %986 = vmatprep.subr.mxu0 0.0
        %987 = vmatpush1.msra.mxu0 %v940
        %988 = vmatprep.subr.mxu0 0.0
        %989 = vmatpush1.msra.mxu0 %v941
        %990 = vmatprep.subr.mxu0 0.0
        %991 = vmatpush1.msra.mxu0 0.0
        %992 = vmatprep.subr.mxu0 0.0
        %993 = vmatpush1.msra.mxu0 0.0
        %994 = vmatprep.subr.mxu0 0.0
        %995 = vmatpush1.msra.mxu0 0.0
        %996 = vmatprep.subr.mxu0 0.0
        %997 = vmatpush1.msra.mxu0 0.0
        %998 = vmatprep.subr.mxu0 0.0
        %999 = vmatpush1.msra.mxu0 0.0
        %1000 = vmatprep.subr.mxu0 0.0
        %1001 = vmatpush1.msra.mxu0 0.0
        %1002 = vmatprep.subr.mxu0 0.0
        %1003 = vmatpush1.msra.mxu0 0.0
        %1004 = vmatprep.subr.mxu0 0.0
        %1005 = vmatpush1.msra.mxu0 0.0
        %1006 = vmatprep.subr.mxu0 0.0
        %1007 = vmatpush1.msra.mxu0 0.0
        %1008 = vmatprep.subr.mxu0 0.0
        %1009 = vmatpush1.msra.mxu0 0.0
        %1010 = vmatprep.subr.mxu0 0.0
        %1011 = vmatpush1.msra.mxu0 0.0
        %1012 = vmatprep.subr.mxu0 0.0
        %1013 = vmatpush1.msra.mxu0 0.0
        %1014 = vmatprep.subr.mxu0 0.0
        %1015 = vmatpush1.msra.mxu0 0.0
        %1016 = vmatprep.subr.mxu0 0.0
        %1017 = vmatpush1.msra.mxu0 0.0
        %1018 = vmatprep.subr.mxu0 0.0
        %1019 = vmatpush1.msra.mxu0 0.0
        %1020 = vmatprep.subr.mxu0 0.0
        %1021 = vmatpush1.msra.mxu0 0.0
        %1022 = vmatprep.mubr.f32.mxu0 0.0
        %1023 = vmatmul.mubr.f32.gmra.mrb[0].mxu0 %v916
        %v1024 = vpop.f32.mrb[0].mxu0
        %v1025 = vadd.f32 0.0, %v1024
        %v1026 = vpop.f32.mrb[0].mxu0
        %1027 = vdwg.mxu0
        %1028 = vmatprep.subr.mxu0 0.0
        %1029 = vmatpush1.msra.mxu0 %v942
        %1030 = vmatprep.subr.mxu0 0.0
        %1031 = vmatpush1.msra.mxu0 %v943
        %1032 = vmatprep.subr.mxu0 0.0
        %1033 = vmatpush1.msra.mxu0 %v944
        %1034 = vmatprep.subr.mxu0 0.0
        %1035 = vmatpush1.msra.mxu0 %v945
        %1036 = vmatprep.subr.mxu0 0.0
        %1037 = vmatpush1.msra.mxu0 %v946
        %1038 = vmatprep.subr.mxu0 0.0
        %1039 = vmatpush1.msra.mxu0 %v947
        %1040 = vmatprep.subr.mxu0 0.0
        %1041 = vmatpush1.msra.mxu0 %v948
        %1042 = vmatprep.subr.mxu0 0.0
        %1043 = vmatpush1.msra.mxu0 %v949
        %1044 = vmatprep.subr.mxu0 0.0
        %1045 = vmatpush1.msra.mxu0 %v950
        %1046 = vmatprep.subr.mxu0 0.0
        %1047 = vmatpush1.msra.mxu0 %v951
        %1048 = vmatprep.subr.mxu0 0.0
        %1049 = vmatpush1.msra.mxu0 %v952
        %1050 = vmatprep.subr.mxu0 0.0
        %1051 = vmatpush1.msra.mxu0 %v953
        %1052 = vmatprep.subr.mxu0 0.0
        %1053 = vmatpush1.msra.mxu0 %v954
        %1054 = vmatprep.subr.mxu0 0.0
        %1055 = vmatpush1.msra.mxu0 %v955
        %1056 = vmatprep.subr.mxu0 0.0
        %1057 = vmatpush1.msra.mxu0 %v956
        %1058 = vmatprep.subr.mxu0 0.0
        %1059 = vmatpush1.msra.mxu0 %v957
        %1060 = vmatprep.subr.mxu0 0.0
        %1061 = vmatpush1.msra.mxu0 0.0
        %1062 = vmatprep.subr.mxu0 0.0
        %1063 = vmatpush1.msra.mxu0 0.0
        %1064 = vmatprep.subr.mxu0 0.0
        %1065 = vmatpush1.msra.mxu0 0.0
        %1066 = vmatprep.subr.mxu0 0.0
        %1067 = vmatpush1.msra.mxu0 0.0
        %1068 = vmatprep.subr.mxu0 0.0
        %1069 = vmatpush1.msra.mxu0 0.0
        %1070 = vmatprep.subr.mxu0 0.0
        %1071 = vmatpush1.msra.mxu0 0.0
        %1072 = vmatprep.subr.mxu0 0.0
        %1073 = vmatpush1.msra.mxu0 0.0
        %1074 = vmatprep.subr.mxu0 0.0
        %1075 = vmatpush1.msra.mxu0 0.0
        %1076 = vmatprep.subr.mxu0 0.0
        %1077 = vmatpush1.msra.mxu0 0.0
        %1078 = vmatprep.subr.mxu0 0.0
        %1079 = vmatpush1.msra.mxu0 0.0
        %1080 = vmatprep.subr.mxu0 0.0
        %1081 = vmatpush1.msra.mxu0 0.0
        %1082 = vmatprep.subr.mxu0 0.0
        %1083 = vmatpush1.msra.mxu0 0.0
        %1084 = vmatprep.subr.mxu0 0.0
        %1085 = vmatpush1.msra.mxu0 0.0
        %1086 = vmatprep.subr.mxu0 0.0
        %1087 = vmatpush1.msra.mxu0 0.0
        %1088 = vmatprep.subr.mxu0 0.0
        %1089 = vmatpush1.msra.mxu0 0.0
        %1090 = vmatprep.subr.mxu0 0.0
        %1091 = vmatpush1.msra.mxu0 0.0
        %1092 = vmatprep.mubr.f32.mxu0 0.0
        %1093 = vmatmul.mubr.f32.gmra.mrb[0].mxu0 %v923
        %v1094 = vpop.f32.mrb[0].mxu0
        %v1095 = vadd.f32 0.0, %v1094
        %v1096 = vpop.f32.mrb[0].mxu0
        %1097 = vdwg.mxu0
        %v1098 = vld [vmem:[%s5] sm:$0x3]
        %v1100 = vrot.slane %v1098, 1
        %v1103 = vadd.f32 %v1025, %v1098
        %v1104 = vadd.f32 %v1095, %v1100
        %v1107 = vrot.slane %v1104, 7
        %vm1108 = vcmask 1041409
        %v1109 = vsel %vm1108, %v1107, %v1103
        %vm1111 = vcmask 123904
        %1112 = vst.msk [vmem:[%s318] sm:$0x3] %vm1111, %v1109
      $region52: #{reid_forward.1} parent=43 // pred_fallthru
        _
      %p1113 = scmp.lt.s32.totalorder %s23, 1
      %s1114 = scalar_select %p1113, %s23, 1
      %s1115 = smul.addr %s1114, 2
      %s1116 = scalar_lea.vmem %s6, %s1115
      %s1117 = smul.u32 2, %s24
      %p1118 = scmp.lt.s32.totalorder %s23, 1
      %s1119 = scalar_select %p1118, %s23, 1
      %p1120 = scmp.lt.s32.totalorder %s1117, 1
      %s1121 = scalar_select %p1120, %s1117, 1
      %s1122 = smul.addr %s1119, 2
      %s1123 = sadd.s32 %s1121, %s1122
      %s1124 = smul.addr %s1123, 2
      %s1125 = scalar_lea.vmem %s7, %s1124
      // Predicated region
      $region53: #{reid_forward.1} parent=43 // pred_check
        %p1126 = pneg %p182
      $region54: #{reid_forward.1} parent=43 // pred_check_branch
        %1128 = sbr.rel (%p1126) target = $region56
      $region55: #{reid_forward.1} parent=43 // pred_region
        _
      $region56: #{reid_forward.1} parent=43 // pred_fallthru
        _
      // Predicated region
      $region57: #{reid_forward.1} parent=43 // pred_check
        %p1129 = pneg %p210
      $region58: #{reid_forward.1} parent=43 // pred_check_branch
        %1131 = sbr.rel (%p1129) target = $region60
      $region59: #{reid_forward.1} parent=43 // pred_region
        %s1132 = smul.u32 2, %s24
      $region60: #{reid_forward.1} parent=43 // pred_fallthru
        _
    $region44: #{reid_forward.1} parent=5 // pred_fallthru
      _
    %p1133 = scmp.le.s32.totalorder 2, %s14
    // Predicated region
    $region61: #{reid_forward.1} parent=5 // pred_check
      %p1134 = pneg %p1133
    $region62: #{reid_forward.1} parent=5 // pred_check_branch
      %1136 = sbr.rel (%p1134) target = $region64
    $region63: #{reid_forward.1} parent=5 // pred_region
      %s1137 = ssub.s32 %s14, 2
      // Predicated region
      $region65: #{reid_forward.1} parent=63 // pred_check
        %p1138 = pneg %p188
      $region66: #{reid_forward.1} parent=63 // pred_check_branch
        %1140 = sbr.rel (%p1138) target = $region68
      $region67: #{reid_forward.1} parent=63 // pred_region
        %p1141 = scmp.lt.s32.totalorder %s25, 1
        %s1142 = scalar_select %p1141, %s25, 1
        %s1143 = smul.addr %s1142, 2
        %s1144 = scalar_lea.vmem %s6, %s1143
      $region68: #{reid_forward.1} parent=63 // pred_fallthru
        _
      // Predicated region
      $region69: #{reid_forward.1} parent=63 // pred_check
        %p1145 = pneg %p216
      $region70: #{reid_forward.1} parent=63 // pred_check_branch
        %1147 = sbr.rel (%p1145) target = $region72
      $region71: #{reid_forward.1} parent=63 // pred_region
        %s1148 = smul.u32 2, %s26
        %p1149 = scmp.lt.s32.totalorder %s25, 1
        %s1150 = scalar_select %p1149, %s25, 1
        %p1151 = scmp.lt.s32.totalorder %s1148, 1
        %s1152 = scalar_select %p1151, %s1148, 1
        %s1153 = smul.addr %s1150, 2
        %s1154 = sadd.s32 %s1152, %s1153
        %s1155 = smul.addr %s1154, 2
        %s1156 = scalar_lea.vmem %s7, %s1155
      $region72: #{reid_forward.1} parent=63 // pred_fallthru
        _
    $region64: #{reid_forward.1} parent=5 // pred_fallthru
      _
  $region6: #{reid_forward.1} parent=0 // loop_footer
    %s18 = sadd.s32 1, %s14
  $region7: #{reid_forward.1} parent=0 // loop_footer_branch
    %13 = sbr.rel target = $region3
  $region8: #{reid_forward.1} parent=0 // loop_exit
    _

</llo_original>
